<compile_context>
chip_gen: v6e
topology: v6e:2x2x1
jax: 0.10.0
libtpu: 0.0.40
codegen_flags: <defaults>
</compile_context>

<pallas_src>
import functools

import numpy as np
import jax
import jax.numpy as jnp
from jax.experimental import pallas as pl
from jax.experimental.pallas import tpu as pltpu

MIX_SIZE = 2   # module default mix_size=2
ALPHA = 1.0    # module default alpha=1
LANE = 128
SUBLANE = 8


# ----------------------------- fused kernel ---------------------------------

def _fused_mixup_loss_kernel(w_ref, x_ref, xe_ref, wl_ref, b_ref, tgt_ref,
                             loss_ref, acc_ref, *, mix_size, num_classes):
    """One grid step (i = batch tile, k = D-reduction tile).

    w_ref   : SMEM [mix_size]            Dirichlet weights (f32)
    x_ref   : VMEM [tm, tk]              data tile (bf16)
    xe_ref  : VMEM [mix_size-1, tm, tk]  permuted data tiles (bf16)
    wl_ref  : VMEM [tk, Kp]              linear weights tile (bf16)
    b_ref   : VMEM [1, Kp]               bias, zero-padded (f32)
    tgt_ref : VMEM [tm, 128]             int32; column m < mix_size = target_m
    loss_ref: VMEM [1, 8, 128]           per-batch-tile weighted CE sum (splat)
    acc_ref : VMEM [tm, Kp] f32          logits accumulator across k
    """
    k = pl.program_id(1)

    @pl.when(k == 0)
    def _init():
        acc_ref[...] = jnp.zeros_like(acc_ref)

    # --- mixup: weighted sum of the permuted copies, VMEM-only (f32 VPU) ---
    mix = w_ref[0] * x_ref[...].astype(jnp.float32)
    for m in range(1, mix_size):
        mix = mix + w_ref[m] * xe_ref[m - 1].astype(jnp.float32)

    # --- model matmul: bf16 MXU, f32 accumulation over the D tiles ---
    acc_ref[...] += jnp.dot(mix.astype(jnp.bfloat16), wl_ref[...],
                            preferred_element_type=jnp.float32)

    # --- loss epilogue on the last reduction step; logits never leave VMEM ---
    @pl.when(k == pl.num_programs(1) - 1)
    def _finalize():
        logits = acc_ref[...] + b_ref[...]                        # [tm, Kp] f32
        col = jax.lax.broadcasted_iota(jnp.int32, logits.shape, 1)
        masked = jnp.where(col < num_classes, logits, -jnp.inf)   # kill pad lanes
        mx = jnp.max(masked, axis=-1, keepdims=True)
        lse = mx + jnp.log(jnp.sum(jnp.exp(masked - mx), axis=-1, keepdims=True))
        tgt = tgt_ref[...]                                        # [tm, 128] i32
        total = jnp.float32(0.0)
        for m in range(mix_size):
            t = tgt[:, m:m + 1]                                   # [tm, 1]
            picked = jnp.sum(jnp.where(col == t, logits, 0.0),
                             axis=-1, keepdims=True)              # [tm, 1]
            total = total + w_ref[m] * jnp.sum(lse - picked)      # weight * sum CE
        loss_ref[...] = jnp.full(loss_ref.shape, total, jnp.float32)


# ----------------------------- wrappers -------------------------------------

def fused_mixup_loss(weights, data_flat, x_extra, W_pad, b_pad, tgt_pad,
                     num_classes, tm, tk):
    B, D = data_flat.shape
    Kp = W_pad.shape[1]
    n_extra = x_extra.shape[0]
    mix_size = n_extra + 1
    n_bt = B // tm
    n_kt = D // tk

    kernel = functools.partial(_fused_mixup_loss_kernel,
                               mix_size=mix_size, num_classes=num_classes)

    partials = pl.pallas_call(
        kernel,
        out_shape=jax.ShapeDtypeStruct((n_bt, SUBLANE, LANE), jnp.float32),
        grid_spec=pltpu.PrefetchScalarGridSpec(
            num_scalar_prefetch=0,
            grid=(n_bt, n_kt),
            in_specs=[
                pl.BlockSpec(memory_space=pltpu.MemorySpace.SMEM),        # weights
                pl.BlockSpec((tm, tk), lambda i, k: (i, k)),              # data
                pl.BlockSpec((n_extra, tm, tk), lambda i, k: (0, i, k)),  # permuted
                pl.BlockSpec((tk, Kp), lambda i, k: (k, 0)),              # W
                pl.BlockSpec((1, Kp), lambda i, k: (0, 0)),               # bias
                pl.BlockSpec((tm, LANE), lambda i, k: (i, 0)),            # targets
            ],
            out_specs=pl.BlockSpec((1, SUBLANE, LANE), lambda i, k: (i, 0, 0)),
            scratch_shapes=[pltpu.VMEM((tm, Kp), jnp.float32)],
        ),
        compiler_params=pltpu.CompilerParams(
            dimension_semantics=("parallel", "arbitrary"),
            vmem_limit_bytes=32 * 1024 * 1024,
        ),
    )(weights, data_flat, x_extra, W_pad, b_pad, tgt_pad)

    # partial = sum_{rows in tile} sum_m w_m * CE_m ; final = sum(partials) / B
    return jnp.sum(partials[:, 0, 0]) / B


def general_mixup_loss(data, target, W_lin, b_lin, num_classes, key,
                       alpha=ALPHA, mix_size=MIX_SIZE):
    """Forward pass of GeneralMixupLoss with a linear model + cross-entropy."""
    assert mix_size >= 2
    B = data.shape[0]
    D = int(np.prod(data.shape[1:]))
    k_dir, k_perm = jax.random.split(key, 2)

    # np.random.dirichlet([alpha]*mix_size) -> jax.random.dirichlet (glue)
    weights = jax.random.dirichlet(
        k_dir, jnp.full((mix_size,), alpha, jnp.float32)).astype(jnp.float32)

    # bf16 activations / model weights for the MXU; f32 mix weights & CE math.
    data_flat = data.reshape(B, D).astype(jnp.bfloat16)

    # torch.randperm per extra mix component (glue gather in plain JAX). Only
    # the permuted copies are materialized; no stack of the original data.
    perm_keys = jax.random.split(k_perm, mix_size - 1)
    extra, tgt_cols = [], [target.astype(jnp.int32)]
    for i in range(1, mix_size):
        perm = jax.random.permutation(perm_keys[i - 1], B)
        extra.append(data_flat[perm])
        tgt_cols.append(target[perm].astype(jnp.int32))
    x_extra = jnp.stack(extra, axis=0)                    # [mix_size-1, B, D]

    # integer targets, lane-padded (no [mix_size, B, K] one-hot)
    tgt_pad = jnp.zeros((B, LANE), jnp.int32)
    tgt_pad = tgt_pad.at[:, :mix_size].set(jnp.stack(tgt_cols, axis=1))

    # lane-dense model parameters: pad K up to a multiple of 128
    K = num_classes
    Kp = ((K + LANE - 1) // LANE) * LANE
    W_pad = jnp.zeros((D, Kp), jnp.bfloat16).at[:, :K].set(W_lin.astype(jnp.bfloat16))
    b_pad = jnp.zeros((1, Kp), jnp.float32).at[:, :K].set(
        b_lin.reshape(1, K).astype(jnp.float32))

    # Tile sizes: sized against the tightest (v7x, 64 MiB) VMEM budget with
    # double-buffering; small problems collapse to full-extent blocks.
    if B <= 256:
        tm = B
    elif B % 256 == 0:
        tm = 256
    else:
        tm = B
    if D <= 512:
        tk = D
    elif D % 512 == 0:
        tk = 512
    else:
        tk = D
    assert B % tm == 0 and (tm % SUBLANE == 0 or tm == B)
    assert D % tk == 0 and (tk % LANE == 0 or tk == D)

    loss = fused_mixup_loss(weights, data_flat, x_extra, W_pad, b_pad, tgt_pad,
                            num_classes, tm, tk)
    return loss, (weights, data_flat, x_extra, tgt_pad)


# ------------------------------- main ----------------------------------------

if __name__ == "__main__":
    B, C, H, Wsp = 8, 4, 16, 16
    D = C * H * Wsp
    K = 8  # num classes

    key = jax.random.PRNGKey(0)
    k_data, k_tgt, k_w, k_loss = jax.random.split(key, 4)

    data = jax.random.normal(k_data, (B, C, H, Wsp), dtype=jnp.float32)
    target = jax.random.randint(k_tgt, (B,), 0, K)

    # deterministic synthetic "model" parameters: one linear layer D -> K
    W_lin = (jax.random.normal(k_w, (D, K), dtype=jnp.float32) / np.sqrt(D)).astype(jnp.float32)
    b_lin = jnp.zeros((1, K), dtype=jnp.float32)

    loss, (weights, data_bf, x_extra, tgt_pad) = general_mixup_loss(
        data, target, W_lin, b_lin, K, k_loss)
    loss = jax.block_until_ready(loss)

    # pure-JAX reference (same bf16-cast inputs as the kernel, f32 accumulate)
    x0 = data_bf.astype(jnp.float32)
    mix_ref = weights[0] * x0
    for m in range(1, MIX_SIZE):
        mix_ref = mix_ref + weights[m] * x_extra[m - 1].astype(jnp.float32)
    mix_bf = mix_ref.astype(jnp.bfloat16).astype(jnp.float32)
    W_bf = W_lin.astype(jnp.bfloat16).astype(jnp.float32)
    logits_ref = jnp.dot(mix_bf, W_bf, precision=jax.lax.Precision.HIGHEST) + b_lin
    lse = jax.scipy.special.logsumexp(logits_ref, axis=-1)
    rows = jnp.arange(B)
    loss_ref = jnp.float32(0.0)
    for m in range(MIX_SIZE):
        picked = logits_ref[rows, tgt_pad[:, m]]
        loss_ref = loss_ref + weights[m] * jnp.mean(lse - picked)

    assert np.allclose(np.asarray(loss), np.asarray(loss_ref),
                       rtol=1e-3, atol=1e-3), (float(loss), float(loss_ref))

    print("KERNEL_OK")
</pallas_src>

<mosaic_0001>
module attributes {stable_mosaic.version = 11 : i64} {
  func.func @_fused_mixup_loss_kernel(%arg0: i32, %arg1: i32, %arg2: memref<2xf32, #tpu.memory_space<smem>>, %arg3: memref<8x512xbf16, #tpu.memory_space<vmem>>, %arg4: memref<1x8x512xbf16, #tpu.memory_space<vmem>>, %arg5: memref<512x128xbf16, #tpu.memory_space<vmem>>, %arg6: memref<1x128xf32, #tpu.memory_space<vmem>>, %arg7: memref<8x128xi32, #tpu.memory_space<vmem>>, %arg8: memref<1x8x128xf32, #tpu.memory_space<vmem>>, %arg9: memref<8x128xf32, #tpu.memory_space<vmem>>) attributes {dimension_semantics = [#tpu.dimension_semantics<parallel>, #tpu.dimension_semantics<arbitrary>], iteration_bounds = array<i64: 1, 2>, scalar_prefetch = 0 : i64, scratch_operands = 1 : i64, tpu.core_type = #tpu.core_type<tc>, window_params = [{transform_indices = @transform_0, window_bounds = array<i64: 2>}, {transform_indices = @transform_1, window_bounds = array<i64: 8, 512>}, {transform_indices = @transform_2, window_bounds = array<i64: 1, 8, 512>}, {transform_indices = @transform_3, window_bounds = array<i64: 512, 128>}, {pipeline_mode = #tpu.pipeline_mode<synchronous>, transform_indices = @transform_4, window_bounds = array<i64: 1, 128>}, {transform_indices = @transform_5, window_bounds = array<i64: 8, 128>}, {transform_indices = @transform_6, window_bounds = array<i64: 1, 8, 128>}]} {
    %c0_i32 = arith.constant 0 : i32
    %0 = arith.cmpi eq, %arg1, %c0_i32 : i32
    %1 = arith.extui %0 : i1 to i32
    %c0_i32_0 = arith.constant 0 : i32
    %2 = arith.cmpi ne, %1, %c0_i32_0 : i32
    scf.if %2 {
      %cst_13 = arith.constant 0.000000e+00 : f32
      %24 = vector.broadcast %cst_13 : f32 to vector<8x128xf32>
      %c0_14 = arith.constant 0 : index
      %c0_15 = arith.constant 0 : index
      %25 = vector.load %arg9[%c0_14, %c0_15] : memref<8x128xf32, #tpu.memory_space<vmem>>, vector<8x128xf32>
      tpu.vector_store %arg9[%c0_14, %c0_15], %24 {strides = array<i32>} : memref<8x128xf32, #tpu.memory_space<vmem>>, vector<8x128xf32>,
    } else {
    }
    %c0 = arith.constant 0 : index
    %3 = memref.load %arg2[%c0] : memref<2xf32, #tpu.memory_space<smem>>
    %c0_1 = arith.constant 0 : index
    %c0_2 = arith.constant 0 : index
    %4 = vector.load %arg3[%c0_1, %c0_2] : memref<8x512xbf16, #tpu.memory_space<vmem>>, vector<8x512xbf16>
    %5 = arith.extf %4 : vector<8x512xbf16> to vector<8x512xf32>
    %6 = vector.broadcast %3 : f32 to vector<8x512xf32>
    %7 = arith.mulf %6, %5 : vector<8x512xf32>
    %c1 = arith.constant 1 : index
    %8 = memref.load %arg2[%c1] : memref<2xf32, #tpu.memory_space<smem>>
    %c0_3 = arith.constant 0 : index
    %c0_4 = arith.constant 0 : index
    %c0_5 = arith.constant 0 : index
    %9 = vector.load %arg4[%c0_3, %c0_4, %c0_5] : memref<1x8x512xbf16, #tpu.memory_space<vmem>>, vector<1x8x512xbf16>
    %10 = vector.shape_cast %9 : vector<1x8x512xbf16> to vector<8x512xbf16>
    %11 = arith.extf %10 : vector<8x512xbf16> to vector<8x512xf32>
    %12 = vector.broadcast %8 : f32 to vector<8x512xf32>
    %13 = arith.mulf %12, %11 : vector<8x512xf32>
    %14 = arith.addf %7, %13 : vector<8x512xf32>
    %c0_6 = arith.constant 0 : index
    %c0_7 = arith.constant 0 : index
    %15 = vector.load %arg9[%c0_6, %c0_7] : memref<8x128xf32, #tpu.memory_space<vmem>>, vector<8x128xf32>
    %16 = arith.truncf %14 : vector<8x512xf32> to vector<8x512xbf16>
    %c0_8 = arith.constant 0 : index
    %c0_9 = arith.constant 0 : index
    %17 = vector.load %arg5[%c0_8, %c0_9] : memref<512x128xbf16, #tpu.memory_space<vmem>>, vector<512x128xbf16>
    %cst = arith.constant dense<0.000000e+00> : vector<8x128xf32>
    %18 = tpu.matmul %16, %17, %cst {dimension_numbers = #tpu.dot_dimension_numbers<[1], [0], [0], [1], [0, 0, 1, 1], [], []>} : vector<8x512xbf16>, vector<512x128xbf16>, vector<8x128xf32> -> vector<8x128xf32>
    %19 = arith.addf %15, %18 : vector<8x128xf32>
    %c0_10 = arith.constant 0 : index
    %c0_11 = arith.constant 0 : index
    %20 = vector.load %arg9[%c0_10, %c0_11] : memref<8x128xf32, #tpu.memory_space<vmem>>, vector<8x128xf32>
    tpu.vector_store %arg9[%c0_10, %c0_11], %19 {strides = array<i32>} : memref<8x128xf32, #tpu.memory_space<vmem>>, vector<8x128xf32>,
    %c1_i32 = arith.constant 1 : i32
    %21 = arith.cmpi eq, %arg1, %c1_i32 : i32
    %22 = arith.extui %21 : i1 to i32
    %c0_i32_12 = arith.constant 0 : i32
    %23 = arith.cmpi ne, %22, %c0_i32_12 : i32
    scf.if %23 {
      %c0_13 = arith.constant 0 : index
      %c0_14 = arith.constant 0 : index
      %24 = vector.load %arg9[%c0_13, %c0_14] : memref<8x128xf32, #tpu.memory_space<vmem>>, vector<8x128xf32>
      %c0_15 = arith.constant 0 : index
      %c0_16 = arith.constant 0 : index
      %25 = vector.load %arg6[%c0_15, %c0_16] : memref<1x128xf32, #tpu.memory_space<vmem>>, vector<1x128xf32>
      %26 = vector.broadcast %25 : vector<1x128xf32> to vector<8x128xf32>
      %27 = arith.addf %24, %26 : vector<8x128xf32>
      %28 = tpu.iota {dimensions = array<i32: 1>} : vector<8x128xi32>
      %c8_i32 = arith.constant 8 : i32
      %29 = vector.broadcast %c8_i32 : i32 to vector<8x128xi32>
      %30 = arith.cmpi slt, %28, %29 : vector<8x128xi32>
      %cst_17 = arith.constant 0xFF800000 : f32
      %31 = vector.broadcast %cst_17 : f32 to vector<8x128xf32>
      %32 = arith.select %30, %27, %31 : vector<8x128xi1>, vector<8x128xf32>
      %cst_18 = arith.constant dense<0xFF800000> : vector<8xf32>
      %33 = vector.multi_reduction <maximumf>, %32, %cst_18 [1] : vector<8x128xf32> to vector<8xf32>
      %34 = vector.shape_cast %33 : vector<8xf32> to vector<8x1xf32>
      %35 = vector.broadcast %34 : vector<8x1xf32> to vector<8x128xf32>
      %36 = arith.subf %32, %35 : vector<8x128xf32>
      %37 = math.exp %36 : vector<8x128xf32>
      %cst_19 = arith.constant dense<0.000000e+00> : vector<8xf32>
      %38 = vector.multi_reduction <add>, %37, %cst_19 [1] : vector<8x128xf32> to vector<8xf32>
      %39 = vector.shape_cast %38 : vector<8xf32> to vector<8x1xf32>
      %40 = math.log %39 : vector<8x1xf32>
      %41 = arith.addf %34, %40 : vector<8x1xf32>
      %c0_20 = arith.constant 0 : index
      %c0_21 = arith.constant 0 : index
      %42 = vector.load %arg7[%c0_20, %c0_21] : memref<8x128xi32, #tpu.memory_space<vmem>>, vector<8x128xi32>
      %43 = vector.extract_strided_slice %42 {offsets = [0, 0], sizes = [8, 1], strides = [1, 1]} : vector<8x128xi32> to vector<8x1xi32>
      %44 = vector.broadcast %43 : vector<8x1xi32> to vector<8x128xi32>
      %45 = arith.cmpi eq, %28, %44 : vector<8x128xi32>
      %cst_22 = arith.constant 0.000000e+00 : f32
      %46 = vector.broadcast %cst_22 : f32 to vector<8x128xf32>
      %47 = arith.select %45, %27, %46 : vector<8x128xi1>, vector<8x128xf32>
      %cst_23 = arith.constant dense<0.000000e+00> : vector<8xf32>
      %48 = vector.multi_reduction <add>, %47, %cst_23 [1] : vector<8x128xf32> to vector<8xf32>
      %49 = vector.shape_cast %48 : vector<8xf32> to vector<8x1xf32>
      %c0_24 = arith.constant 0 : index
      %50 = memref.load %arg2[%c0_24] : memref<2xf32, #tpu.memory_space<smem>>
      %51 = arith.subf %41, %49 : vector<8x1xf32>
      %52 = vector.shape_cast %51 : vector<8x1xf32> to vector<1x8x1xf32>
      %cst_25 = arith.constant dense<0.000000e+00> : vector<1xf32>
      %53 = vector.multi_reduction <add>, %52, %cst_25 [1, 2] : vector<1x8x1xf32> to vector<1xf32>
      %54 = vector.shape_cast %53 : vector<1xf32> to vector<1x1x1xf32>
      %55 = vector.extract %54[0, 0, 0] : f32 from vector<1x1x1xf32>
      %56 = arith.mulf %50, %55 : f32
      %cst_26 = arith.constant 0.000000e+00 : f32
      %57 = arith.addf %cst_26, %56 : f32
      %58 = vector.extract_strided_slice %42 {offsets = [0, 1], sizes = [8, 1], strides = [1, 1]} : vector<8x128xi32> to vector<8x1xi32>
      %59 = vector.broadcast %58 : vector<8x1xi32> to vector<8x128xi32>
      %60 = arith.cmpi eq, %28, %59 : vector<8x128xi32>
      %cst_27 = arith.constant 0.000000e+00 : f32
      %61 = vector.broadcast %cst_27 : f32 to vector<8x128xf32>
      %62 = arith.select %60, %27, %61 : vector<8x128xi1>, vector<8x128xf32>
      %cst_28 = arith.constant dense<0.000000e+00> : vector<8xf32>
      %63 = vector.multi_reduction <add>, %62, %cst_28 [1] : vector<8x128xf32> to vector<8xf32>
      %64 = vector.shape_cast %63 : vector<8xf32> to vector<8x1xf32>
      %c1_29 = arith.constant 1 : index
      %65 = memref.load %arg2[%c1_29] : memref<2xf32, #tpu.memory_space<smem>>
      %66 = arith.subf %41, %64 : vector<8x1xf32>
      %67 = vector.shape_cast %66 : vector<8x1xf32> to vector<1x8x1xf32>
      %cst_30 = arith.constant dense<0.000000e+00> : vector<1xf32>
      %68 = vector.multi_reduction <add>, %67, %cst_30 [1, 2] : vector<1x8x1xf32> to vector<1xf32>
      %69 = vector.shape_cast %68 : vector<1xf32> to vector<1x1x1xf32>
      %70 = vector.extract %69[0, 0, 0] : f32 from vector<1x1x1xf32>
      %71 = arith.mulf %65, %70 : f32
      %72 = arith.addf %57, %71 : f32
      %73 = vector.broadcast %72 : f32 to vector<1x8x128xf32>
      %c0_31 = arith.constant 0 : index
      %c0_32 = arith.constant 0 : index
      %c0_33 = arith.constant 0 : index
      %74 = vector.load %arg8[%c0_31, %c0_32, %c0_33] : memref<1x8x128xf32, #tpu.memory_space<vmem>>, vector<1x8x128xf32>
      tpu.vector_store %arg8[%c0_31, %c0_32, %c0_33], %73 {strides = array<i32>} : memref<1x8x128xf32, #tpu.memory_space<vmem>>, vector<1x8x128xf32>,
    } else {
    }
    return
  }
  func.func @transform_0(%arg0: i32, %arg1: i32) -> i32 {
    %c0_i32 = arith.constant 0 : i32
    %c0_i32_0 = arith.constant 0 : i32
    return %c0_i32 : i32
  }
  func.func @transform_1(%arg0: i32, %arg1: i32) -> (i32, i32) {
    %c0_i32 = arith.constant 0 : i32
    return %arg0, %arg1 : i32, i32
  }
  func.func @transform_2(%arg0: i32, %arg1: i32) -> (i32, i32, i32) {
    %c0_i32 = arith.constant 0 : i32
    %c0_i32_0 = arith.constant 0 : i32
    return %c0_i32, %arg0, %arg1 : i32, i32, i32
  }
  func.func @transform_3(%arg0: i32, %arg1: i32) -> (i32, i32) {
    %c0_i32 = arith.constant 0 : i32
    %c0_i32_0 = arith.constant 0 : i32
    return %arg1, %c0_i32 : i32, i32
  }
  func.func @transform_4(%arg0: i32, %arg1: i32) -> (i32, i32) {
    %c0_i32 = arith.constant 0 : i32
    %c0_i32_0 = arith.constant 0 : i32
    %c0_i32_1 = arith.constant 0 : i32
    return %c0_i32, %c0_i32_0 : i32, i32
  }
  func.func @transform_5(%arg0: i32, %arg1: i32) -> (i32, i32) {
    %c0_i32 = arith.constant 0 : i32
    %c0_i32_0 = arith.constant 0 : i32
    return %arg0, %c0_i32 : i32, i32
  }
  func.func @transform_6(%arg0: i32, %arg1: i32) -> (i32, i32, i32) {
    %c0_i32 = arith.constant 0 : i32
    %c0_i32_0 = arith.constant 0 : i32
    %c0_i32_1 = arith.constant 0 : i32
    return %arg0, %c0_i32, %c0_i32_0 : i32, i32, i32
  }
}

</mosaic_0001>

<llo_original>
// kernel: tpu_custom_call.1
$region0: #{tpu_custom_call.1}
  #allocation0 [shape = 'u32[]', space=smem, size = 0x4, offset = 0x4, fixed_abs, tag = 'smem constant byte address 0x4 - core index']
  #allocation1 [shape = 'u32[144,128]{1,0:T(1,128)}', space=vmem, size = 0x12000, scoped, tag = 'internal scratch']
  #allocation2 [shape = 'f32[8,128]{1,0:T(8,128)}', space=vmem, size = 0x1000, scoped, tag = 'scratch operand']
  %s0 = inlined_call_operand.hbm [shape: f32[2], index: 0, kind: input, shape index: {}]
  %s1 = inlined_call_operand.hbm [shape: bf16[8,1024], index: 1, kind: input, shape index: {}]
  %s2 = inlined_call_operand.hbm [shape: bf16[1,8,1024], index: 2, kind: input, shape index: {}]
  %s3 = inlined_call_operand.hbm [shape: bf16[1024,128], index: 3, kind: input, shape index: {}]
  %s4 = inlined_call_operand.vmem [shape: f32[1,128], index: 4, kind: input, shape index: {}]
  %s5 = inlined_call_operand.vmem [shape: s32[8,128], index: 5, kind: input, shape index: {}]
  %s6 = inlined_call_operand.hbm [shape: f32[1,8,128], index: 6, kind: output, shape index: {}]
  %s7 = sld [smem:[#allocation0]]
  $region81: #{tpu_custom_call.1} parent=0
    _
  %s9 = ssub.s32 1, %s7
  %s10 = scalar_select 0, %s9, %s7
  $region1: #{tpu_custom_call.1} parent=0
    #allocation3 [shape = 'u8[512]{0}', space=smem, size = 0x200, scoped, tag = 'input window, operand 0, single buffered']
    #allocation4 [shape = 's32[2]{0}', space=sflag, size = 0x8, scoped, tag = 'scoped memory for tpu_custom_call.1']
    #allocation5 [shape = 's32[2]{0}', space=sflag, size = 0x8, scoped, tag = 'scoped memory for tpu_custom_call.1']
    #allocation6 [shape = 's32[2]{0}', space=sflag, size = 0x8, scoped, tag = 'scoped memory for tpu_custom_call.1']
    #allocation7 [shape = 'u8[16384]{0}', space=vmem, size = 0x4000, scoped, tag = 'input window, operand 1']
    #allocation8 [shape = 'u8[16384]{0}', space=vmem, size = 0x4000, scoped, tag = 'input window, operand 2']
    #allocation9 [shape = 's32[2]{0}', space=sflag, size = 0x8, scoped, tag = 'scoped memory for tpu_custom_call.1']
    #allocation10 [shape = 'u8[262144]{0}', space=vmem, size = 0x40000, scoped, tag = 'input window, operand 3']
    #allocation11 [shape = 'u8[4096]{0}', space=vmem, size = 0x1000, scoped, tag = 'output window, operand 0, single buffered']
    %11 = vsyncpa [#allocation6], 0
    %12 = vsyncpa [#allocation4], 0
    %s13 = scalar_lea.sflag [#allocation4], 1
    %14 = vsyncpa %s13, 0
    %15 = vsyncpa [#allocation9], 0
    %s16 = scalar_lea.sflag [#allocation9], 1
    %17 = vsyncpa %s16, 0
    %18 = vsyncpa [#allocation5], 0
    loop: start=0, step=1, limit=4
    $region2: #{tpu_custom_call.1} parent=1 // loop_pre_header
      _
    $region3: #{tpu_custom_call.1} parent=1 // loop_header
      %s20 = sphi 0, %s24
      %p21 = scmp.ge.s32.totalorder %s20, 4
      %s27 = sphi 0, %s39
      %s28 = sphi 0, %s35
      %s29 = sphi 0, %s27
      %s30 = sphi 0, %s28
      %s31 = sphi 0, %s29
      %s32 = sphi 0, %s30
      %s40 = sphi 0, %s40
      %s42 = sphi 0, %s40
      %s43 = sphi 0, %s42
      %s57 = sphi 0, %s43
      %s65 = sphi 0, %s67
      %s68 = sphi 0, %s65
      %s69 = sphi 0, %s68
      %s85 = sphi 0, %s69
      %s93 = sphi 0, %s95
      %s96 = sphi 0, %s93
      %s97 = sphi 0, %s96
      %s113 = sphi 0, %s97
      %s119 = sphi 0, %s121
      %s122 = sphi 0, %s119
      %s123 = sphi 0, %s122
      %s139 = sphi 0, %s123
      %s143 = sphi 0, %s143
      %s145 = sphi 0, %s143
      %s146 = sphi 0, %s145
      %s160 = sphi 0, %s146
      %s166 = sphi 0, %s168
      %s169 = sphi 0, %s166
      %s170 = sphi 0, %s169
      %s186 = sphi 0, %s170
      %s192 = sphi 0, %s194
      %s195 = sphi 0, %s192
      %s196 = sphi 0, %s195
      %s212 = sphi 0, %s196
    $region4: #{tpu_custom_call.1} parent=1 // loop_header_branch
      %23 = sbr.rel (%p21) target = $region8
    $region5: #{tpu_custom_call.1} parent=1 // loop_body
      %s25 = ssub.s32 %s20, 1
      %s26 = ssub.s32 %s20, 2
      %s33 = sadd.s32 1, %s28
      %p34 = scmp.ge.s32.totalorder %s33, 2
      %s35 = scalar_select %p34, 0, %s33
      %s36 = sadd.s32 1, %s27
      %s37 = scalar_select %p34, %s36, %s27
      %p38 = scmp.ge.s32.totalorder %s37, 1
      %s39 = scalar_select %p38, 0, %s37
      %s41 = sadd.s32 %s40, 1
      %p44 = scmp.eq.s32.totalorder %s20, 1
      %p45 = scmp.ne.s32.totalorder %s40, %s42
      %p46 = scmp.eq.s32.totalorder %s20, 0
      %p47 = por %p45, %p46
      %p48 = scmp.ne.s32.totalorder %s40, %s42
      %p49 = scmp.eq.s32.totalorder %s25, 1
      %p50 = por %p48, %p49
      %p51 = scmp.ne.s32.totalorder %s42, %s43
      %p52 = scmp.eq.s32.totalorder %s25, 0
      %p53 = por %p51, %p52
      %p54 = scmp.ne.s32.totalorder %s42, %s43
      %p55 = scmp.eq.s32.totalorder %s26, 1
      %p56 = por %p54, %p55
      %p58 = scmp.ne.s32.totalorder %s43, %s57
      %p59 = scmp.eq.s32.totalorder %s26, 0
      %p60 = por %p58, %p59
      %s61 = ssub.s32 %s27, %s39
      %s62 = ssub.s32 %s28, %s35
      %s63 = sor.u32 %s61, %s62
      %p64 = scmp.eq.s32.totalorder %s63, 0
      %s66 = sadd.s32 %s65, 1
      %s67 = scalar_select %p64, %s65, %s66
      %p70 = pneg %p64
      %p71 = scmp.eq.s32.totalorder %s20, 1
      %p72 = por %p70, %p71
      %p73 = scmp.ne.s32.totalorder %s65, %s68
      %p74 = scmp.eq.s32.totalorder %s20, 0
      %p75 = por %p73, %p74
      %p76 = scmp.ne.s32.totalorder %s65, %s68
      %p77 = scmp.eq.s32.totalorder %s25, 1
      %p78 = por %p76, %p77
      %p79 = scmp.ne.s32.totalorder %s68, %s69
      %p80 = scmp.eq.s32.totalorder %s25, 0
      %p81 = por %p79, %p80
      %p82 = scmp.ne.s32.totalorder %s68, %s69
      %p83 = scmp.eq.s32.totalorder %s26, 1
      %p84 = por %p82, %p83
      %p86 = scmp.ne.s32.totalorder %s69, %s85
      %p87 = scmp.eq.s32.totalorder %s26, 0
      %p88 = por %p86, %p87
      %s89 = ssub.s32 %s27, %s39
      %s90 = ssub.s32 %s28, %s35
      %s91 = sor.u32 %s89, %s90
      %p92 = scmp.eq.s32.totalorder %s91, 0
      %s94 = sadd.s32 %s93, 1
      %s95 = scalar_select %p92, %s93, %s94
      %p98 = pneg %p92
      %p99 = scmp.eq.s32.totalorder %s20, 1
      %p100 = por %p98, %p99
      %p101 = scmp.ne.s32.totalorder %s93, %s96
      %p102 = scmp.eq.s32.totalorder %s20, 0
      %p103 = por %p101, %p102
      %p104 = scmp.ne.s32.totalorder %s93, %s96
      %p105 = scmp.eq.s32.totalorder %s25, 1
      %p106 = por %p104, %p105
      %p107 = scmp.ne.s32.totalorder %s96, %s97
      %p108 = scmp.eq.s32.totalorder %s25, 0
      %p109 = por %p107, %p108
      %p110 = scmp.ne.s32.totalorder %s96, %s97
      %p111 = scmp.eq.s32.totalorder %s26, 1
      %p112 = por %p110, %p111
      %p114 = scmp.ne.s32.totalorder %s97, %s113
      %p115 = scmp.eq.s32.totalorder %s26, 0
      %p116 = por %p114, %p115
      %s117 = ssub.s32 %s28, %s35
      %p118 = scmp.eq.s32.totalorder %s117, 0
      %s120 = sadd.s32 %s119, 1
      %s121 = scalar_select %p118, %s119, %s120
      %p124 = pneg %p118
      %p125 = scmp.eq.s32.totalorder %s20, 1
      %p126 = por %p124, %p125
      %p127 = scmp.ne.s32.totalorder %s119, %s122
      %p128 = scmp.eq.s32.totalorder %s20, 0
      %p129 = por %p127, %p128
      %p130 = scmp.ne.s32.totalorder %s119, %s122
      %p131 = scmp.eq.s32.totalorder %s25, 1
      %p132 = por %p130, %p131
      %p133 = scmp.ne.s32.totalorder %s122, %s123
      %p134 = scmp.eq.s32.totalorder %s25, 0
      %p135 = por %p133, %p134
      %p136 = scmp.ne.s32.totalorder %s122, %s123
      %p137 = scmp.eq.s32.totalorder %s26, 1
      %p138 = por %p136, %p137
      %p140 = scmp.ne.s32.totalorder %s123, %s139
      %p141 = scmp.eq.s32.totalorder %s26, 0
      %p142 = por %p140, %p141
      %s144 = sadd.s32 %s143, 1
      %p147 = scmp.eq.s32.totalorder %s20, 1
      %p148 = scmp.ne.s32.totalorder %s143, %s145
      %p149 = scmp.eq.s32.totalorder %s20, 0
      %p150 = por %p148, %p149
      %p151 = scmp.ne.s32.totalorder %s143, %s145
      %p152 = scmp.eq.s32.totalorder %s25, 1
      %p153 = por %p151, %p152
      %p154 = scmp.ne.s32.totalorder %s145, %s146
      %p155 = scmp.eq.s32.totalorder %s25, 0
      %p156 = por %p154, %p155
      %p157 = scmp.ne.s32.totalorder %s145, %s146
      %p158 = scmp.eq.s32.totalorder %s26, 1
      %p159 = por %p157, %p158
      %p161 = scmp.ne.s32.totalorder %s146, %s160
      %p162 = scmp.eq.s32.totalorder %s26, 0
      %p163 = por %p161, %p162
      %s164 = ssub.s32 %s27, %s39
      %p165 = scmp.eq.s32.totalorder %s164, 0
      %s167 = sadd.s32 %s166, 1
      %s168 = scalar_select %p165, %s166, %s167
      %p171 = pneg %p165
      %p172 = scmp.eq.s32.totalorder %s20, 1
      %p173 = por %p171, %p172
      %p174 = scmp.ne.s32.totalorder %s166, %s169
      %p175 = scmp.eq.s32.totalorder %s20, 0
      %p176 = por %p174, %p175
      %p177 = scmp.ne.s32.totalorder %s166, %s169
      %p178 = scmp.eq.s32.totalorder %s25, 1
      %p179 = por %p177, %p178
      %p180 = scmp.ne.s32.totalorder %s169, %s170
      %p181 = scmp.eq.s32.totalorder %s25, 0
      %p182 = por %p180, %p181
      %p183 = scmp.ne.s32.totalorder %s169, %s170
      %p184 = scmp.eq.s32.totalorder %s26, 1
      %p185 = por %p183, %p184
      %p187 = scmp.ne.s32.totalorder %s170, %s186
      %p188 = scmp.eq.s32.totalorder %s26, 0
      %p189 = por %p187, %p188
      %s190 = ssub.s32 %s27, %s39
      %p191 = scmp.eq.s32.totalorder %s190, 0
      %s193 = sadd.s32 %s192, 1
      %s194 = scalar_select %p191, %s192, %s193
      %p197 = pneg %p191
      %p198 = scmp.eq.s32.totalorder %s20, 1
      %p199 = por %p197, %p198
      %p200 = scmp.ne.s32.totalorder %s192, %s195
      %p201 = scmp.eq.s32.totalorder %s20, 0
      %p202 = por %p200, %p201
      %p203 = scmp.ne.s32.totalorder %s192, %s195
      %p204 = scmp.eq.s32.totalorder %s25, 1
      %p205 = por %p203, %p204
      %p206 = scmp.ne.s32.totalorder %s195, %s196
      %p207 = scmp.eq.s32.totalorder %s25, 0
      %p208 = por %p206, %p207
      %p209 = scmp.ne.s32.totalorder %s195, %s196
      %p210 = scmp.eq.s32.totalorder %s26, 1
      %p211 = por %p209, %p210
      %p213 = scmp.ne.s32.totalorder %s196, %s212
      %p214 = scmp.eq.s32.totalorder %s26, 0
      %p215 = por %p213, %p214
      %p216 = scmp.le.s32.totalorder 1, %s20
      %p217 = scmp.lt.s32.totalorder %s20, 3
      %p218 = pnand %p216, %p217
      %p219 = pneg %p218
      // Predicated region
      $region9: #{tpu_custom_call.1} parent=5 // pred_check
        _
      $region10: #{tpu_custom_call.1} parent=5 // pred_check_branch
        %221 = sbr.rel (%p218) target = $region12
      $region11: #{tpu_custom_call.1} parent=5 // pred_region
        %s222 = ssub.s32 %s20, 1
        // Predicated region
        $region13: #{tpu_custom_call.1} parent=11 // pred_check
          %p223 = pneg %p53
        $region14: #{tpu_custom_call.1} parent=11 // pred_check_branch
          %225 = sbr.rel (%p223) target = $region16
        $region15: #{tpu_custom_call.1} parent=11 // pred_region
          %s227 = ssub.s32 16, 16
          %228 = vsyncadd [#allocation6], %s227
          %231 = dma.hbm_to_smem %s0, 16, [#allocation3], [#allocation6]
        $region16: #{tpu_custom_call.1} parent=11 // pred_fallthru
          _
        // Predicated region
        $region17: #{tpu_custom_call.1} parent=11 // pred_check
          %p232 = pneg %p156
        $region18: #{tpu_custom_call.1} parent=11 // pred_check_branch
          %234 = sbr.rel (%p232) target = $region20
        $region19: #{tpu_custom_call.1} parent=11 // pred_region
          _
        $region20: #{tpu_custom_call.1} parent=11 // pred_fallthru
          _
        // Predicated region
        $region21: #{tpu_custom_call.1} parent=11 // pred_check
          %p235 = pneg %p182
        $region22: #{tpu_custom_call.1} parent=11 // pred_check_branch
          %237 = sbr.rel (%p235) target = $region24
        $region23: #{tpu_custom_call.1} parent=11 // pred_region
          %p238 = scmp.lt.s32.totalorder %s29, 0
          %s239 = scalar_select %p238, %s29, 0
          %s240 = smul.addr %s239, 8
          %s241 = scalar_lea.vmem %s5, %s240
        $region24: #{tpu_custom_call.1} parent=11 // pred_fallthru
          _
      $region12: #{tpu_custom_call.1} parent=5 // pred_fallthru
        _
      %p242 = scmp.lt.s32.totalorder %s20, 2
      // Predicated region
      $region25: #{tpu_custom_call.1} parent=5 // pred_check
        %p243 = pneg %p242
      $region26: #{tpu_custom_call.1} parent=5 // pred_check_branch
        %245 = sbr.rel (%p243) target = $region28
      $region27: #{tpu_custom_call.1} parent=5 // pred_region
        // Predicated region
        $region29: #{tpu_custom_call.1} parent=27 // pred_check
          %p246 = pneg %p75
        $region30: #{tpu_custom_call.1} parent=27 // pred_check_branch
          %248 = sbr.rel (%p246) target = $region32
        $region31: #{tpu_custom_call.1} parent=27 // pred_region
          %s249 = sand.u32 %s65, 1
          %s250 = scalar_lea.sflag [#allocation4], %s249
          %s251 = sand.u32 %s65, 1
          %s252 = smul.addr %s251, 16
          %s253 = scalar_lea.vmem [#allocation7], %s252
          %s254 = smul.u32 4, %s28
          %s256 = ssub.s32 256, 256
          %257 = vsyncadd %s250, %s256
          %s258 = smul.addr %s27, 8
          %s259 = sadd.s32 %s254, %s258
          %s260 = smul.addr %s259, 64
          %s261 = scalar_lea.hbm %s1, %s260
          %s263 = sshll.u32 %s253, 4
          %s264 = int_to_ptr.vmem [resolvable:$true] %s263
          %266 = dma.hbm_to_vmem [thread:$0]  %s261, 256, %s264, %s250
        $region32: #{tpu_custom_call.1} parent=27 // pred_fallthru
          _
        // Predicated region
        $region33: #{tpu_custom_call.1} parent=27 // pred_check
          %p267 = pneg %p103
        $region34: #{tpu_custom_call.1} parent=27 // pred_check_branch
          %269 = sbr.rel (%p267) target = $region36
        $region35: #{tpu_custom_call.1} parent=27 // pred_region
          %s270 = sand.u32 %s20, 1
          %s271 = scalar_lea.sflag [#allocation9], %s270
          %s272 = sand.u32 %s93, 1
          %s273 = smul.addr %s272, 16
          %s274 = scalar_lea.vmem [#allocation8], %s273
          %s275 = smul.u32 4, %s28
          %s277 = ssub.s32 256, 256
          %278 = vsyncadd %s271, %s277
          %s279 = smul.addr %s27, 8
          %s280 = sadd.s32 %s275, %s279
          %s281 = smul.addr %s280, 64
          %s282 = scalar_lea.hbm %s2, %s281
          %s284 = sshll.u32 %s274, 4
          %s285 = int_to_ptr.vmem [resolvable:$true] %s284
          %287 = dma.hbm_to_vmem [thread:$0]  %s282, 256, %s285, %s271
        $region36: #{tpu_custom_call.1} parent=27 // pred_fallthru
          _
        // Predicated region
        $region37: #{tpu_custom_call.1} parent=27 // pred_check
          %p288 = pneg %p129
        $region38: #{tpu_custom_call.1} parent=27 // pred_check_branch
          %290 = sbr.rel (%p288) target = $region40
        $region39: #{tpu_custom_call.1} parent=27 // pred_region
          %s291 = sand.u32 %s20, 1
          %s292 = scalar_lea.sflag [#allocation9], %s291
          %s293 = sand.u32 %s119, 1
          %s294 = smul.addr %s293, 256
          %s295 = scalar_lea.vmem [#allocation10], %s294
          %s296 = smul.u32 64, %s28
          %s298 = ssub.s32 4096, 4096
          %299 = vsyncadd %s292, %s298
          %s300 = smul.addr %s296, 64
          %s301 = scalar_lea.hbm %s3, %s300
          %s302 = sshll.u32 %s295, 4
          %s303 = int_to_ptr.vmem [resolvable:$true] %s302
          %308 = dma.hbm_to_vmem [thread:$0]  %s301, 4096, %s303, %s292, 64, 64, 4
        $region40: #{tpu_custom_call.1} parent=27 // pred_fallthru
          _
      $region28: #{tpu_custom_call.1} parent=5 // pred_fallthru
        _
      %p309 = scmp.le.s32.totalorder 1, %s20
      %p310 = scmp.lt.s32.totalorder %s20, 3
      %p311 = pnand %p309, %p310
      %p312 = pneg %p311
      // Predicated region
      $region41: #{tpu_custom_call.1} parent=5 // pred_check
        _
      $region42: #{tpu_custom_call.1} parent=5 // pred_check_branch
        %314 = sbr.rel (%p311) target = $region44
      $region43: #{tpu_custom_call.1} parent=5 // pred_region
        %s315 = ssub.s32 %s20, 1
        // Predicated region
        $region45: #{tpu_custom_call.1} parent=43 // pred_check
          %p316 = pneg %p53
        $region46: #{tpu_custom_call.1} parent=43 // pred_check_branch
          %318 = sbr.rel (%p316) target = $region48
        $region47: #{tpu_custom_call.1} parent=43 // pred_region
          %319 = dma.done [#allocation6], 16
        $region48: #{tpu_custom_call.1} parent=43 // pred_fallthru
          _
        %s320 = sand.u32 %s68, 1
        %s321 = scalar_lea.sflag [#allocation4], %s320
        %s322 = sand.u32 %s68, 1
        %s323 = smul.addr %s322, 16
        %s324 = scalar_lea.vmem [#allocation7], %s323
        // Predicated region
        $region49: #{tpu_custom_call.1} parent=43 // pred_check
          %p325 = pneg %p81
        $region50: #{tpu_custom_call.1} parent=43 // pred_check_branch
          %327 = sbr.rel (%p325) target = $region52
        $region51: #{tpu_custom_call.1} parent=43 // pred_region
          %328 = dma.done %s321, 256
        $region52: #{tpu_custom_call.1} parent=43 // pred_fallthru
          _
        %s329 = sand.u32 %s25, 1
        %s330 = scalar_lea.sflag [#allocation9], %s329
        %s331 = sand.u32 %s96, 1
        %s332 = smul.addr %s331, 16
        %s333 = scalar_lea.vmem [#allocation8], %s332
        // Predicated region
        $region53: #{tpu_custom_call.1} parent=43 // pred_check
          %p334 = pneg %p109
        $region54: #{tpu_custom_call.1} parent=43 // pred_check_branch
          %336 = sbr.rel (%p334) target = $region56
        $region55: #{tpu_custom_call.1} parent=43 // pred_region
          %337 = dma.done %s330, 256
        $region56: #{tpu_custom_call.1} parent=43 // pred_fallthru
          _
        %s338 = sand.u32 %s25, 1
        %s339 = scalar_lea.sflag [#allocation9], %s338
        %s340 = sand.u32 %s122, 1
        %s341 = smul.addr %s340, 256
        %s342 = scalar_lea.vmem [#allocation10], %s341
        // Predicated region
        $region57: #{tpu_custom_call.1} parent=43 // pred_check
          %p343 = pneg %p135
        $region58: #{tpu_custom_call.1} parent=43 // pred_check_branch
          %345 = sbr.rel (%p343) target = $region60
        $region59: #{tpu_custom_call.1} parent=43 // pred_region
          %346 = dma.done %s339, 4096
        $region60: #{tpu_custom_call.1} parent=43 // pred_fallthru
          _
        %347 = sfence
        %p348 = pneg %p53
        %p349 = pneg %p50
        %s350 = sand.u32 %s68, 1
        %s351 = scalar_lea.sflag [#allocation4], %s350
        %s352 = sand.u32 %s68, 1
        %s353 = smul.addr %s352, 16
        %s354 = scalar_lea.vmem [#allocation7], %s353
        %p355 = pneg %p81
        %p356 = pneg %p78
        %s357 = sand.u32 %s25, 1
        %s358 = scalar_lea.sflag [#allocation9], %s357
        %s359 = sand.u32 %s96, 1
        %s360 = smul.addr %s359, 16
        %s361 = scalar_lea.vmem [#allocation8], %s360
        %p362 = pneg %p109
        %p363 = pneg %p106
        %s364 = sand.u32 %s25, 1
        %s365 = scalar_lea.sflag [#allocation9], %s364
        %s366 = sand.u32 %s122, 1
        %s367 = smul.addr %s366, 256
        %s368 = scalar_lea.vmem [#allocation10], %s367
        %p369 = pneg %p135
        %p370 = pneg %p132
        %p371 = pneg %p156
        %p372 = pneg %p153
        %p373 = scmp.lt.s32.totalorder %s29, 0
        %s374 = scalar_select %p373, %s29, 0
        %s375 = smul.addr %s374, 8
        %s376 = scalar_lea.vmem %s5, %s375
        %p377 = pneg %p182
        %p378 = pneg %p179
        %p379 = pneg %p208
        %p380 = pneg %p205
        %s381 = smul.u32 4, %s30
        %s382 = smul.u32 4, %s30
        %s383 = smul.u32 64, %s30
        %p384 = scmp.lt.s32.totalorder %s29, 0
        %s385 = scalar_select %p384, %s29, 0
        %s386 = smul.addr %s385, 8
        %s387 = scalar_lea.vmem %s5, %s386
        %p389 = scmp.eq.s32.totalorder %s30, 0
        // Predicated region
        $region61: #{tpu_custom_call.1} parent=43 // pred_check
          %p390 = pneg %p389
        $region62: #{tpu_custom_call.1} parent=43 // pred_check_branch
          %392 = sbr.rel (%p390) target = $region64
        $region63: #{tpu_custom_call.1} parent=43 // pred_region
          %393 = vst [vmem:[#allocation2] sm:$0xff] 0.0
        $region64: #{tpu_custom_call.1} parent=43 // pred_fallthru
          _
        %s394 = sld [smem:[#allocation3]]
        %v395 = vld [vmem:[%s324] sm:$0xff]
        %v396 = vld [vmem:[%s324 + $0x8] sm:$0xff]
        %v397 = vunpack.c.l.bf16 %v395
        %v398 = vunpack.c.h.bf16 %v395
        %v399 = vunpack.c.l.bf16 %v396
        %v400 = vunpack.c.h.bf16 %v396
        %v401 = vstv %s394
        %v402 = vmul.f32 %v401, %v397
        %v403 = vmul.f32 %v401, %v398
        %v404 = vmul.f32 %v401, %v399
        %v405 = vmul.f32 %v401, %v400
        %s406 = sld [smem:[#allocation3 + $0x1]]
        %v407 = vld [vmem:[%s333] sm:$0xff]
        %v408 = vld [vmem:[%s333 + $0x8] sm:$0xff]
        %v409 = vunpack.c.l.bf16 %v407
        %v410 = vunpack.c.h.bf16 %v407
        %v411 = vunpack.c.l.bf16 %v408
        %v412 = vunpack.c.h.bf16 %v408
        %v413 = vstv %s406
        %v414 = vmul.f32 %v413, %v409
        %v415 = vmul.f32 %v413, %v410
        %v416 = vmul.f32 %v413, %v411
        %v417 = vmul.f32 %v413, %v412
        %v418 = vadd.f32 %v402, %v414
        %v419 = vadd.f32 %v403, %v415
        %v420 = vadd.f32 %v404, %v416
        %v421 = vadd.f32 %v405, %v417
        %v422 = vld [vmem:[#allocation2] sm:$0xff]
        %v423 = vpack.c.bf16 %v418, %v418
        %v424 = vpack.c.bf16 %v419, %v419
        %v425 = vpack.c.bf16 %v420, %v420
        %v426 = vpack.c.bf16 %v421, %v421
        %v427 = vld [vmem:[%s342] sm:$0xf]
        %v428 = vld [vmem:[%s342 + $0x4] sm:$0xf]
        %v429 = vld [vmem:[%s342 + $0x8] sm:$0xf]
        %v430 = vld [vmem:[%s342 + $0xc] sm:$0xf]
        %v431 = vld [vmem:[%s342 + $0x10] sm:$0xf]
        %v432 = vld [vmem:[%s342 + $0x14] sm:$0xf]
        %v433 = vld [vmem:[%s342 + $0x18] sm:$0xf]
        %v434 = vld [vmem:[%s342 + $0x1c] sm:$0xf]
        %v435 = vld [vmem:[%s342 + $0x20] sm:$0xf]
        %v436 = vld [vmem:[%s342 + $0x24] sm:$0xf]
        %v437 = vld [vmem:[%s342 + $0x28] sm:$0xf]
        %v438 = vld [vmem:[%s342 + $0x2c] sm:$0xf]
        %v439 = vld [vmem:[%s342 + $0x30] sm:$0xf]
        %v440 = vld [vmem:[%s342 + $0x34] sm:$0xf]
        %v441 = vld [vmem:[%s342 + $0x38] sm:$0xf]
        %v442 = vld [vmem:[%s342 + $0x3c] sm:$0xf]
        %v443 = vld [vmem:[%s342 + $0x40] sm:$0xf]
        %v444 = vld [vmem:[%s342 + $0x44] sm:$0xf]
        %v445 = vld [vmem:[%s342 + $0x48] sm:$0xf]
        %v446 = vld [vmem:[%s342 + $0x4c] sm:$0xf]
        %v447 = vld [vmem:[%s342 + $0x50] sm:$0xf]
        %v448 = vld [vmem:[%s342 + $0x54] sm:$0xf]
        %v449 = vld [vmem:[%s342 + $0x58] sm:$0xf]
        %v450 = vld [vmem:[%s342 + $0x5c] sm:$0xf]
        %v451 = vld [vmem:[%s342 + $0x60] sm:$0xf]
        %v452 = vld [vmem:[%s342 + $0x64] sm:$0xf]
        %v453 = vld [vmem:[%s342 + $0x68] sm:$0xf]
        %v454 = vld [vmem:[%s342 + $0x6c] sm:$0xf]
        %v455 = vld [vmem:[%s342 + $0x70] sm:$0xf]
        %v456 = vld [vmem:[%s342 + $0x74] sm:$0xf]
        %v457 = vld [vmem:[%s342 + $0x78] sm:$0xf]
        %v458 = vld [vmem:[%s342 + $0x7c] sm:$0xf]
        %v459 = vld [vmem:[%s342 + $0x80] sm:$0xf]
        %v460 = vld [vmem:[%s342 + $0x84] sm:$0xf]
        %v461 = vld [vmem:[%s342 + $0x88] sm:$0xf]
        %v462 = vld [vmem:[%s342 + $0x8c] sm:$0xf]
        %v463 = vld [vmem:[%s342 + $0x90] sm:$0xf]
        %v464 = vld [vmem:[%s342 + $0x94] sm:$0xf]
        %v465 = vld [vmem:[%s342 + $0x98] sm:$0xf]
        %v466 = vld [vmem:[%s342 + $0x9c] sm:$0xf]
        %v467 = vld [vmem:[%s342 + $0xa0] sm:$0xf]
        %v468 = vld [vmem:[%s342 + $0xa4] sm:$0xf]
        %v469 = vld [vmem:[%s342 + $0xa8] sm:$0xf]
        %v470 = vld [vmem:[%s342 + $0xac] sm:$0xf]
        %v471 = vld [vmem:[%s342 + $0xb0] sm:$0xf]
        %v472 = vld [vmem:[%s342 + $0xb4] sm:$0xf]
        %v473 = vld [vmem:[%s342 + $0xb8] sm:$0xf]
        %v474 = vld [vmem:[%s342 + $0xbc] sm:$0xf]
        %v475 = vld [vmem:[%s342 + $0xc0] sm:$0xf]
        %v476 = vld [vmem:[%s342 + $0xc4] sm:$0xf]
        %v477 = vld [vmem:[%s342 + $0xc8] sm:$0xf]
        %v478 = vld [vmem:[%s342 + $0xcc] sm:$0xf]
        %v479 = vld [vmem:[%s342 + $0xd0] sm:$0xf]
        %v480 = vld [vmem:[%s342 + $0xd4] sm:$0xf]
        %v481 = vld [vmem:[%s342 + $0xd8] sm:$0xf]
        %v482 = vld [vmem:[%s342 + $0xdc] sm:$0xf]
        %v483 = vld [vmem:[%s342 + $0xe0] sm:$0xf]
        %v484 = vld [vmem:[%s342 + $0xe4] sm:$0xf]
        %v485 = vld [vmem:[%s342 + $0xe8] sm:$0xf]
        %v486 = vld [vmem:[%s342 + $0xec] sm:$0xf]
        %v487 = vld [vmem:[%s342 + $0xf0] sm:$0xf]
        %v488 = vld [vmem:[%s342 + $0xf4] sm:$0xf]
        %v489 = vld [vmem:[%s342 + $0xf8] sm:$0xf]
        %v490 = vld [vmem:[%s342 + $0xfc] sm:$0xf]
        %v555 = vunpack.c.l.b16 %v427
        %v556 = vunpack.c.l.b16 %v428
        %v557 = vunpack.c.l.b16 %v429
        %v558 = vunpack.c.l.b16 %v430
        %v559 = vunpack.c.l.b16 %v431
        %v560 = vunpack.c.l.b16 %v432
        %v561 = vunpack.c.l.b16 %v433
        %v562 = vunpack.c.l.b16 %v434
        %v563 = vunpack.c.l.b16 %v435
        %v564 = vunpack.c.l.b16 %v436
        %v565 = vunpack.c.l.b16 %v437
        %v566 = vunpack.c.l.b16 %v438
        %v567 = vunpack.c.l.b16 %v439
        %v568 = vunpack.c.l.b16 %v440
        %v569 = vunpack.c.l.b16 %v441
        %v570 = vunpack.c.l.b16 %v442
        %v571 = vunpack.c.l.b16 %v443
        %v572 = vunpack.c.l.b16 %v444
        %v573 = vunpack.c.l.b16 %v445
        %v574 = vunpack.c.l.b16 %v446
        %v575 = vunpack.c.l.b16 %v447
        %v576 = vunpack.c.l.b16 %v448
        %v577 = vunpack.c.l.b16 %v449
        %v578 = vunpack.c.l.b16 %v450
        %v579 = vunpack.c.l.b16 %v451
        %v580 = vunpack.c.l.b16 %v452
        %v581 = vunpack.c.l.b16 %v453
        %v582 = vunpack.c.l.b16 %v454
        %v583 = vunpack.c.l.b16 %v455
        %v584 = vunpack.c.l.b16 %v456
        %v585 = vunpack.c.l.b16 %v457
        %v586 = vunpack.c.l.b16 %v458
        %v587 = vunpack.c.l.b16 %v459
        %v588 = vunpack.c.l.b16 %v460
        %v589 = vunpack.c.l.b16 %v461
        %v590 = vunpack.c.l.b16 %v462
        %v591 = vunpack.c.l.b16 %v463
        %v592 = vunpack.c.l.b16 %v464
        %v593 = vunpack.c.l.b16 %v465
        %v594 = vunpack.c.l.b16 %v466
        %v595 = vunpack.c.l.b16 %v467
        %v596 = vunpack.c.l.b16 %v468
        %v597 = vunpack.c.l.b16 %v469
        %v598 = vunpack.c.l.b16 %v470
        %v599 = vunpack.c.l.b16 %v471
        %v600 = vunpack.c.l.b16 %v472
        %v601 = vunpack.c.l.b16 %v473
        %v602 = vunpack.c.l.b16 %v474
        %v603 = vunpack.c.l.b16 %v475
        %v604 = vunpack.c.l.b16 %v476
        %v605 = vunpack.c.l.b16 %v477
        %v606 = vunpack.c.l.b16 %v478
        %v607 = vunpack.c.l.b16 %v479
        %v608 = vunpack.c.l.b16 %v480
        %v609 = vunpack.c.l.b16 %v481
        %v610 = vunpack.c.l.b16 %v482
        %v611 = vunpack.c.l.b16 %v483
        %v612 = vunpack.c.l.b16 %v484
        %v613 = vunpack.c.l.b16 %v485
        %v614 = vunpack.c.l.b16 %v486
        %v615 = vunpack.c.l.b16 %v487
        %v616 = vunpack.c.l.b16 %v488
        %v617 = vunpack.c.l.b16 %v489
        %v618 = vunpack.c.l.b16 %v490
        %v619 = vpack.c.b16 %v556, %v555
        %v620 = vpack.c.b16 %v558, %v557
        %v621 = vpack.c.b16 %v560, %v559
        %v622 = vpack.c.b16 %v562, %v561
        %v623 = vpack.c.b16 %v564, %v563
        %v624 = vpack.c.b16 %v566, %v565
        %v625 = vpack.c.b16 %v568, %v567
        %v626 = vpack.c.b16 %v570, %v569
        %v627 = vpack.c.b16 %v572, %v571
        %v628 = vpack.c.b16 %v574, %v573
        %v629 = vpack.c.b16 %v576, %v575
        %v630 = vpack.c.b16 %v578, %v577
        %v631 = vpack.c.b16 %v580, %v579
        %v632 = vpack.c.b16 %v582, %v581
        %v633 = vpack.c.b16 %v584, %v583
        %v634 = vpack.c.b16 %v586, %v585
        %v635 = vpack.c.b16 %v588, %v587
        %v636 = vpack.c.b16 %v590, %v589
        %v637 = vpack.c.b16 %v592, %v591
        %v638 = vpack.c.b16 %v594, %v593
        %v639 = vpack.c.b16 %v596, %v595
        %v640 = vpack.c.b16 %v598, %v597
        %v641 = vpack.c.b16 %v600, %v599
        %v642 = vpack.c.b16 %v602, %v601
        %v643 = vpack.c.b16 %v604, %v603
        %v644 = vpack.c.b16 %v606, %v605
        %v645 = vpack.c.b16 %v608, %v607
        %v646 = vpack.c.b16 %v610, %v609
        %v647 = vpack.c.b16 %v612, %v611
        %v648 = vpack.c.b16 %v614, %v613
        %v649 = vpack.c.b16 %v616, %v615
        %v650 = vpack.c.b16 %v618, %v617
        %683 = vmatprep.subr.bf16.mxu0 0
        %684 = vmatpush1.bf16.msra.mxu0 %v626
        %685 = vmatprep.subr.bf16.mxu0 0
        %686 = vmatpush1.bf16.msra.mxu0 %v625
        %687 = vmatprep.subr.bf16.mxu0 0
        %688 = vmatpush1.bf16.msra.mxu0 %v624
        %689 = vmatprep.subr.bf16.mxu0 0
        %690 = vmatpush1.bf16.msra.mxu0 %v623
        %691 = vmatprep.subr.bf16.mxu0 0
        %692 = vmatpush1.bf16.msra.mxu0 %v622
        %693 = vmatprep.subr.bf16.mxu0 0
        %694 = vmatpush1.bf16.msra.mxu0 %v621
        %695 = vmatprep.subr.bf16.mxu0 0
        %696 = vmatpush1.bf16.msra.mxu0 %v620
        %697 = vmatprep.subr.bf16.mxu0 0
        %698 = vmatpush1.bf16.msra.mxu0 %v619
        %699 = vmatprep.subr.bf16.mxu0 0
        %700 = vmatpush2.bf16.msra.mxu0 %v634
        %701 = vmatprep.subr.bf16.mxu0 0
        %702 = vmatpush2.bf16.msra.mxu0 %v633
        %703 = vmatprep.subr.bf16.mxu0 0
        %704 = vmatpush2.bf16.msra.mxu0 %v632
        %705 = vmatprep.subr.bf16.mxu0 0
        %706 = vmatpush2.bf16.msra.mxu0 %v631
        %707 = vmatprep.subr.bf16.mxu0 0
        %708 = vmatpush2.bf16.msra.mxu0 %v630
        %709 = vmatprep.subr.bf16.mxu0 0
        %710 = vmatpush2.bf16.msra.mxu0 %v629
        %711 = vmatprep.subr.bf16.mxu0 0
        %712 = vmatpush2.bf16.msra.mxu0 %v628
        %713 = vmatprep.subr.bf16.mxu0 0
        %714 = vmatpush2.bf16.msra.mxu0 %v627
        %715 = vmatprep.mubr.bf16.mxu0 %v424
        %716 = vmatmul.mubr.bf16.gmra.mxu0 %v423
        %v717 = vpop.f32.mrf.mxu0
        %v718 = vadd.f32 0.0, %v717
        %v719 = vpop.f32.mrf.mxu0
        %v720 = vpop.f32.mrf.mxu0
        %v721 = vpop.f32.mrf.mxu0
        %722 = vdwg.mxu0
        %723 = vmatprep.subr.bf16.mxu0 0
        %724 = vmatpush1.bf16.msra.mxu0 %v642
        %725 = vmatprep.subr.bf16.mxu0 0
        %726 = vmatpush1.bf16.msra.mxu0 %v641
        %727 = vmatprep.subr.bf16.mxu0 0
        %728 = vmatpush1.bf16.msra.mxu0 %v640
        %729 = vmatprep.subr.bf16.mxu0 0
        %730 = vmatpush1.bf16.msra.mxu0 %v639
        %731 = vmatprep.subr.bf16.mxu0 0
        %732 = vmatpush1.bf16.msra.mxu0 %v638
        %733 = vmatprep.subr.bf16.mxu0 0
        %734 = vmatpush1.bf16.msra.mxu0 %v637
        %735 = vmatprep.subr.bf16.mxu0 0
        %736 = vmatpush1.bf16.msra.mxu0 %v636
        %737 = vmatprep.subr.bf16.mxu0 0
        %738 = vmatpush1.bf16.msra.mxu0 %v635
        %739 = vmatprep.subr.bf16.mxu0 0
        %740 = vmatpush2.bf16.msra.mxu0 %v650
        %741 = vmatprep.subr.bf16.mxu0 0
        %742 = vmatpush2.bf16.msra.mxu0 %v649
        %743 = vmatprep.subr.bf16.mxu0 0
        %744 = vmatpush2.bf16.msra.mxu0 %v648
        %745 = vmatprep.subr.bf16.mxu0 0
        %746 = vmatpush2.bf16.msra.mxu0 %v647
        %747 = vmatprep.subr.bf16.mxu0 0
        %748 = vmatpush2.bf16.msra.mxu0 %v646
        %749 = vmatprep.subr.bf16.mxu0 0
        %750 = vmatpush2.bf16.msra.mxu0 %v645
        %751 = vmatprep.subr.bf16.mxu0 0
        %752 = vmatpush2.bf16.msra.mxu0 %v644
        %753 = vmatprep.subr.bf16.mxu0 0
        %754 = vmatpush2.bf16.msra.mxu0 %v643
        %755 = vmatprep.mubr.bf16.mxu0 %v426
        %756 = vmatmul.mubr.bf16.gmra.mxu0 %v425
        %v757 = vpop.f32.mrf.mxu0
        %v758 = vadd.f32 %v718, %v757
        %v759 = vpop.f32.mrf.mxu0
        %v760 = vpop.f32.mrf.mxu0
        %v761 = vpop.f32.mrf.mxu0
        %762 = vdwg.mxu0
        %v763 = vadd.f32 %v422, %v758
        %764 = vst [vmem:[#allocation2] sm:$0xff] %v763
        %p765 = scmp.eq.s32.totalorder %s30, 1
        // Predicated region
        $region65: #{tpu_custom_call.1} parent=43 // pred_check
          %p766 = pneg %p765
        $region66: #{tpu_custom_call.1} parent=43 // pred_check_branch
          %768 = sbr.rel (%p766) target = $region68
        $region67: #{tpu_custom_call.1} parent=43 // pred_region
          %v769 = vld [vmem:[#allocation2] sm:$0xff]
          %v770 = vld [vmem:[%s4] sm:$0x1]
          %v772 = vlaneseq
          %v773 = vshrl.u32 %v772, 7
          %v774 = vsub.s32 0, %v773
          %v775 = vrot.slane %v770, %v774
          %v777 = vadd.f32 %v769, %v775
          %v778 = vlaneseq
          %v779 = vand.u32 %v778, 127
          %vm780 = vcmp.lt.s32.totalorder %v779, 8
          %v781 = vsel %vm780, %v777, -inf
          %782 = vmax.xlane.f32.xlu0 %v781
          %v783 = vpop.xlane.xlu0 %782
          %v784 = vsub.f32 %v781, %v783
          %v785 = vmul.f32 %v784, 1.442695
          %v786 = vpow.pop %v785
          %787 = vadd.xlane.f32.xlu0 %v786
          %v788 = vpop.xlane.xlu0 %787
          %v789 = vlog2.pop %v788
          %v790 = vmul.f32 %v789, 0.6931472
          %v791 = vadd.f32 %v783, %v790
          %v792 = vld [vmem:[%s387] sm:$0xff]
          %793 = vset.pattern.permute.xlu0 0
          %794 = vperm.xlu0 %793, %v792
          %v795 = vpop.permute.xlu0 %794
          %vm796 = vcmp.eq.s32.totalorder %v779, %v795
          %v797 = vsel %vm796, %v777, 0.0
          %798 = vadd.xlane.f32.xlu0 %v797
          %v799 = vpop.xlane.xlu0 %798
          %s800 = sld [smem:[#allocation3]]
          %v801 = vsub.f32 %v791, %v799
          %vm802 = vcmask 7168
          %v803 = vsel %vm802, %v801, 0.0
          %804 = vadd.xlane.f32.xlu0 %v803
          %v805 = vpop.xlane.xlu0 %804
          %v806 = vrot.slane %v805, 4
          %v807 = vadd.f32 %v805, %v806
          %v808 = vrot.slane %v807, 2
          %v809 = vadd.f32 %v807, %v808
          %v810 = vrot.slane %v809, 1
          %v811 = vadd.f32 %v809, %v810
          %s812 = vtos %v811
          %s813 = smul.f32 %s800, %s812
          %s814 = sadd.f32 %s813, 0.0
          %815 = vset.pattern.permute.xlu0 1
          %816 = vperm.xlu0 %815, %v792
          %v817 = vpop.permute.xlu0 %816
          %vm818 = vcmp.eq.s32.totalorder %v779, %v817
          %v819 = vsel %vm818, %v777, 0.0
          %820 = vadd.xlane.f32.xlu0 %v819
          %v821 = vpop.xlane.xlu0 %820
          %s822 = sld [smem:[#allocation3 + $0x1]]
          %v823 = vsub.f32 %v791, %v821
          %v824 = vsel %vm802, %v823, 0.0
          %825 = vadd.xlane.f32.xlu0 %v824
          %v826 = vpop.xlane.xlu0 %825
          %v827 = vrot.slane %v826, 4
          %v828 = vadd.f32 %v826, %v827
          %v829 = vrot.slane %v828, 2
          %v830 = vadd.f32 %v828, %v829
          %v831 = vrot.slane %v830, 1
          %v832 = vadd.f32 %v830, %v831
          %s833 = vtos %v832
          %s834 = smul.f32 %s822, %s833
          %s835 = sadd.f32 %s814, %s834
          %v836 = vstv %s835
          %837 = vst [vmem:[#allocation11] sm:$0xff] %v836
        $region68: #{tpu_custom_call.1} parent=43 // pred_fallthru
          _
        // Predicated region
        $region69: #{tpu_custom_call.1} parent=43 // pred_check
          %p838 = pneg %p205
        $region70: #{tpu_custom_call.1} parent=43 // pred_check_branch
          %840 = sbr.rel (%p838) target = $region72
        $region71: #{tpu_custom_call.1} parent=43 // pred_region
          %s842 = ssub.s32 128, 128
          %843 = vsyncadd [#allocation5], %s842
          %s844 = smul.addr %s29, 128
          %s845 = scalar_lea.hbm %s6, %s844
          %s847 = sshll.u32 [#allocation11], 4
          %s848 = int_to_ptr.vmem [resolvable:$true] %s847
          %850 = dma.vmem_to_hbm [thread:$0]  %s848, 128, %s845, [#allocation5]
        $region72: #{tpu_custom_call.1} parent=43 // pred_fallthru
          _
        // Predicated region
        $region73: #{tpu_custom_call.1} parent=43 // pred_check
          %p851 = pneg %p205
        $region74: #{tpu_custom_call.1} parent=43 // pred_check_branch
          %853 = sbr.rel (%p851) target = $region76
        $region75: #{tpu_custom_call.1} parent=43 // pred_region
          %854 = dma.done [#allocation5], 128
        $region76: #{tpu_custom_call.1} parent=43 // pred_fallthru
          _
      $region44: #{tpu_custom_call.1} parent=5 // pred_fallthru
        _
      %p855 = scmp.le.s32.totalorder 2, %s20
      // Predicated region
      $region77: #{tpu_custom_call.1} parent=5 // pred_check
        %p856 = pneg %p855
      $region78: #{tpu_custom_call.1} parent=5 // pred_check_branch
        %858 = sbr.rel (%p856) target = $region80
      $region79: #{tpu_custom_call.1} parent=5 // pred_region
        %s859 = ssub.s32 %s20, 2
      $region80: #{tpu_custom_call.1} parent=5 // pred_fallthru
        _
    $region6: #{tpu_custom_call.1} parent=1 // loop_footer
      %s24 = sadd.s32 1, %s20
    $region7: #{tpu_custom_call.1} parent=1 // loop_footer_branch
      %19 = sbr.rel target = $region3
    $region8: #{tpu_custom_call.1} parent=1 // loop_exit
      _
    %860 = vsyncpa [#allocation4], 1
    %s861 = scalar_lea.sflag [#allocation4], 1
    %862 = vsyncpa %s861, 1
    %863 = vsyncpa [#allocation9], 1
    %s864 = scalar_lea.sflag [#allocation9], 1
    %865 = vsyncpa %s864, 1
    %866 = vsyncpa [#allocation5], 1
    %s867 = scalar_lea.sflag [#allocation5], 1
    %868 = vsyncpa %s867, 1
    %869 = vsyncpa [#allocation6], 1
    %s870 = scalar_lea.sflag [#allocation6], 1
    %871 = vsyncpa %s870, 1

</llo_original>
